<compile_context>
chip_gen: v6e
topology: v6e:2x2x1
jax: 0.10.0
libtpu: 0.0.40
codegen_flags: <defaults>
</compile_context>

<pallas_src>
import math

import jax
import jax.numpy as jnp
from jax import lax
from jax.experimental import pallas as pl
from jax.experimental.pallas import tpu as pltpu


def _f32(x):
    # Elementwise/transcendental math stays f32 (v5e has no bf16 VPU/EUP);
    # only MXU operands are downcast (see mxu_dtype below).
    return x if x.dtype == jnp.float32 else x.astype(jnp.float32)


def _layernorm(x, w, b, eps=1e-12):
    # TF-style layernorm (matches the PyTorch LayerNorm in modules.py);
    # rsqrt goes to the EUP instead of a VPU sqrt+divide chain.
    u = jnp.mean(x, axis=-1, keepdims=True)
    s = jnp.mean((x - u) ** 2, axis=-1, keepdims=True)
    return w * ((x - u) * lax.rsqrt(s + eps)) + b


def _make_kernel(mxu_dtype, approx):
    """Build the kernel with the MXU operand dtype / EUP-approx flag baked in."""

    def _recip(x):
        return pl.reciprocal(x, approx=approx)

    def kernel(
        z_ref,       # (Bt, S, H)   batch block of z
        proto_ref,   # (K, H)       stacked prototypes
        small_ref,   # (16, H)      stacked: ln1..ln5 (w,b), w_bias, b_prime, pad
        wt_ref,      # (H, H)       linear weight pre-transposed to (in, out)
        alphas_ref,  # (S, H)
        beta_ref,    # (K, H)       beta_input_seq or beta_label_seq
        out_ref,     # (1, Bt, K*H) lane-dense output block
    ):
        z3 = _f32(z_ref[...])                                   # (Bt, S, H)
        Bt, S, H = z3.shape
        K = proto_ref.shape[0]
        inv_sqrt_h = 1.0 / math.sqrt(H)
        cos_eps2 = 1e-12                                        # (1e-6)^2

        small = _f32(small_ref[...])                            # (16, H)
        ln1w, ln1b = small[0:1], small[1:2]
        ln2w, ln2b = small[2:3], small[3:4]
        ln3w, ln3b = small[4:5], small[5:6]
        ln4w, ln4b = small[6:7], small[7:8]
        ln5w, ln5b = small[8:9], small[9:10]
        w_bias = small[10:11]
        b_prime = small[11:12]

        z = z3.reshape(Bt * S, H)                               # fold batch into M

        # ---------------- intention clustering ----------------
        # Pre-scale by inverse norms so one matmul yields cos_sim directly
        # (clamps keep zero-padded batch rows finite; they are sliced off).
        z1 = _layernorm(z, ln1w, ln1b)                          # (Bt*S, H)
        proto = _layernorm(_f32(proto_ref[...]), ln2w, ln2b)    # (K, H)
        z1n = z1 * lax.rsqrt(
            jnp.maximum(jnp.sum(z1 * z1, axis=-1, keepdims=True), cos_eps2))
        pn = proto * lax.rsqrt(
            jnp.maximum(jnp.sum(proto * proto, axis=-1, keepdims=True), cos_eps2))
        cos_sim = lax.dot_general(
            z1n.astype(mxu_dtype), pn.astype(mxu_dtype),
            (((1,), (1,)), ((), ())),
            preferred_element_type=jnp.float32)                 # (Bt*S, K)
        exp_k = jnp.exp(cos_sim * inv_sqrt_h).reshape(Bt, S, K)
        denom_k = jnp.sum(exp_k, axis=-1, keepdims=True)        # (Bt, S, 1)

        # ---------------- intention weighting ----------------
        alphas = _f32(alphas_ref[...])                          # (S, H)
        keys_tilde = _layernorm((z3 + alphas[None]).reshape(Bt * S, H),
                                ln3w, ln3b)                     # (Bt*S, H)
        lin = lax.dot_general(
            keys_tilde.astype(mxu_dtype), wt_ref[...].astype(mxu_dtype),
            (((1,), (0,)), ((), ())),
            preferred_element_type=jnp.float32) + w_bias        # (Bt*S, H)
        keys = keys_tilde + jnp.maximum(lin, 0.0)

        query = _layernorm(b_prime + alphas[S - 1:S, :] + z3[:, S - 1, :],
                           ln4w, ln4b)                          # (Bt, H)

        # Degenerate N=1 matmul -> VPU multiply + lane reduction.
        nums = jnp.sum(keys.reshape(Bt, S, H) * query[:, None, :],
                       axis=-1, keepdims=True) * inv_sqrt_h     # (Bt, S, 1)
        nums = nums - jnp.max(nums, axis=1, keepdims=True)      # stable softmax
        exp_n = jnp.exp(nums)
        denom_n = jnp.sum(exp_n, axis=1, keepdims=True)         # (Bt, 1, 1)

        # Fused softmax normalizations: one per-(b,s) scale covers both.
        scale = exp_n * _recip(denom_k) * _recip(denom_n)       # (Bt, S, 1)
        attn = exp_k * scale                                    # (Bt, S, K)

        # ---------------- intention aggregation (VPU) ----------------
        # out[b, k*H:(k+1)*H] = LN5(beta[k] + sum_s attn[b,s,k] * z[b,s,:])
        beta = _f32(beta_ref[...])                              # (K, H)
        cols = []
        for k in range(K):                                      # K is small & static
            agg_k = jnp.sum(attn[:, :, k:k + 1] * z3, axis=1)   # (Bt, H)
            enc_k = beta[k:k + 1, :] + agg_k
            cols.append(_layernorm(enc_k, ln5w, ln5b))
        out = jnp.concatenate(cols, axis=-1)                    # (Bt, K*H) lane-dense
        out_ref[0] = out.astype(out_ref.dtype)

    return kernel


def _choose_batch_block(B, S, H, K, z_itemsize):
    """Size the per-step batch block from bytes-per-step and a VMEM budget."""
    row_bytes = S * H * z_itemsize
    # Each grid step should move >= ~512 KiB of z (covers the ~0.35us step
    # overhead at v5e..v7x HBM bandwidths); small batches fall back to 1 step.
    target = 512 * 1024
    bb = min(B, max(1, -(-target // row_bytes)))
    # VMEM budget (~24 MiB working set) sized for v7x's 64 MiB VMEM:
    # 2x double-buffered z block + ~8 live f32 copies of the folded (bb*S, H)
    # working set + (bb*S, K)-sized attention intermediates.
    budget = 24 * 1024 * 1024
    per_row = 2 * row_bytes + 8 * S * H * 4 + 4 * S * K * 4
    bb = max(1, min(bb, budget // max(per_row, 1)))
    return bb


def dss_encoder(is_input_seq, z, params, *, batch_block=None, use_bf16_matmul=None):
    """Pallas DSSEncoder forward. z: (B, S, H) -> (B, K, H)."""
    B, S, H = z.shape
    K = params["prototypes"].shape[0]
    beta = params["beta_input_seq"] if is_input_seq else params["beta_label_seq"]
    pdtype = params["ln1_w"].dtype

    # bf16 MXU operands (and EUP approx reciprocal) only for bf16 callers so
    # f32 callers keep f32-level accuracy.
    if use_bf16_matmul is None:
        use_bf16_matmul = (z.dtype == jnp.bfloat16)
    mxu_dtype = jnp.bfloat16 if use_bf16_matmul else jnp.float32
    approx = bool(use_bf16_matmul)

    z_itemsize = z.dtype.itemsize
    if batch_block is None:
        batch_block = _choose_batch_block(B, S, H, K, z_itemsize)
    batch_block = min(batch_block, B)
    num_steps = -(-B // batch_block)
    Bp = num_steps * batch_block
    if Bp != B:  # zero-pad the batch so the grid tiles evenly (padding is inert)
        z = jnp.concatenate([z, jnp.zeros((Bp - B, S, H), z.dtype)], axis=0)

    # One stacked (16, H) array for all small per-feature params (rows padded
    # to a multiple of 8 sublanes) -> one DMA instead of twelve.
    small = jnp.stack(
        [params["ln1_w"], params["ln1_b"],
         params["ln2_w"], params["ln2_b"],
         params["ln3_w"], params["ln3_b"],
         params["ln4_w"], params["ln4_b"],
         params["ln5_w"], params["ln5_b"],
         params["w_bias"], params["b_prime"]]
        + [jnp.zeros((H,), pdtype)] * 4,
        axis=0)                                                 # (16, H)

    w_t = params["w_weight"].T                                  # (in, out)
    if use_bf16_matmul:
        w_t = w_t.astype(jnp.bfloat16)                          # halve HBM/VMEM bytes

    # VMEM estimate -> vmem_limit_bytes (default scoped limit is 16/32 MiB).
    inv_bytes = ((K * H + 16 * H + S * H + K * H) * jnp.dtype(pdtype).itemsize
                 + H * H * w_t.dtype.itemsize)
    blk_in = batch_block * S * H * z_itemsize
    blk_out = batch_block * K * H * z_itemsize
    work = batch_block * (8 * S * H * 4 + 4 * S * K * 4)
    vmem_est = 2 * (blk_in + blk_out + inv_bytes) + work
    vmem_limit = int(min(64 << 20, max(32 << 20, int(vmem_est * 1.5))))

    full2d = lambda shape: pl.BlockSpec(shape, lambda b: (0, 0))
    kernel = _make_kernel(mxu_dtype, approx)

    out = pl.pallas_call(
        kernel,
        out_shape=jax.ShapeDtypeStruct((num_steps, batch_block, K * H), z.dtype),
        grid=(num_steps,),
        in_specs=[
            pl.BlockSpec((batch_block, S, H), lambda b: (b, 0, 0)),  # z batch block
            full2d((K, H)),            # prototypes
            full2d((16, H)),           # stacked small params
            full2d((H, H)),            # W^T
            full2d((S, H)),            # alphas
            full2d((K, H)),            # beta
        ],
        out_specs=pl.BlockSpec((1, batch_block, K * H), lambda b: (b, 0, 0)),
        compiler_params=pltpu.CompilerParams(
            dimension_semantics=("parallel",),
            vmem_limit_bytes=vmem_limit),
    )(z, params["prototypes"], small, w_t, params["alphas"], beta)

    return out.reshape(Bp, K, H)[:B]


# ---------------- pure-JAX reference (sanity check) ----------------
def dss_encoder_ref(is_input_seq, z, p):
    def ln(x, w, b, eps=1e-12):
        u = jnp.mean(x, axis=-1, keepdims=True)
        s = jnp.mean((x - u) ** 2, axis=-1, keepdims=True)
        return w * ((x - u) / jnp.sqrt(s + eps)) + b

    B, S, H = z.shape
    inv_sqrt_h = 1.0 / math.sqrt(H)

    z1 = ln(z, p["ln1_w"], p["ln1_b"])
    proto = ln(p["prototypes"], p["ln2_w"], p["ln2_b"])
    dots = jnp.einsum("bsh,kh->bsk", z1, proto)
    n1 = jnp.sum(z1 * z1, -1, keepdims=True)
    n2 = jnp.sum(proto * proto, -1)
    cos = dots / jnp.sqrt(jnp.maximum(n1 * n2[None, None, :], 1e-12))
    e = jnp.exp(cos * inv_sqrt_h)
    p_k_i = e / jnp.sum(e, -1, keepdims=True)

    keys_tilde = ln(z + p["alphas"], p["ln3_w"], p["ln3_b"])
    lin = jnp.einsum("bsh,oh->bso", keys_tilde, p["w_weight"]) + p["w_bias"]
    keys = keys_tilde + jnp.maximum(lin, 0.0)
    query = ln(p["b_prime"] + p["alphas"][-1] + z[:, -1, :], p["ln4_w"], p["ln4_b"])
    nums = jnp.einsum("bsh,bh->bs", keys, query)
    en = jnp.exp(nums * inv_sqrt_h)
    p_i = en / jnp.sum(en, 1, keepdims=True)

    attn = p_k_i * p_i[..., None]
    beta = p["beta_input_seq"] if is_input_seq else p["beta_label_seq"]
    enc = beta + jnp.einsum("bsk,bsh->bkh", attn, z)
    return ln(enc, p["ln5_w"], p["ln5_b"])


if __name__ == "__main__":
    B, S, H, K = 2, 8, 32, 4  # batch, max_seq_length, hidden_size, num_intents

    key = jax.random.PRNGKey(0)
    ks = jax.random.split(key, 8)
    bound = 1.0 / math.sqrt(H)

    params = {
        "prototypes":     jax.random.normal(ks[0], (K, H), jnp.float32) * bound,
        "beta_input_seq": jax.random.normal(ks[1], (K, H), jnp.float32) * bound,
        "beta_label_seq": jax.random.normal(ks[2], (K, H), jnp.float32) * bound,
        "w_weight": jax.random.uniform(ks[3], (H, H), jnp.float32, -bound, bound),
        "w_bias":   jax.random.uniform(ks[4], (H,), jnp.float32, -bound, bound),
        "b_prime":  jnp.zeros((H,), jnp.float32),
        "alphas":   jnp.zeros((S, H), jnp.float32),
    }
    for i in range(1, 6):
        params[f"ln{i}_w"] = jnp.ones((H,), jnp.float32)
        params[f"ln{i}_b"] = jnp.zeros((H,), jnp.float32)

    z = jax.random.normal(ks[5], (B, S, H), jnp.float32)

    # f32 path: exact MXU operands + exact reciprocal -> tight tolerance.
    out = jax.block_until_ready(dss_encoder(True, z, params))
    ref = dss_encoder_ref(True, z, params)
    assert out.shape == (B, K, H)
    assert jnp.allclose(out, ref, atol=1e-4, rtol=1e-4), (
        f"f32 max abs diff {jnp.max(jnp.abs(out - ref))}")

    # bf16 path: bf16 MXU operands + EUP approx reciprocal -> loose tolerance.
    z_bf16 = z.astype(jnp.bfloat16)
    out_bf = jax.block_until_ready(dss_encoder(False, z_bf16, params))
    ref_bf = dss_encoder_ref(False, z_bf16.astype(jnp.float32), params)
    assert out_bf.shape == (B, K, H)
    assert jnp.allclose(out_bf.astype(jnp.float32), ref_bf, atol=5e-2, rtol=5e-2), (
        f"bf16 max abs diff {jnp.max(jnp.abs(out_bf.astype(jnp.float32) - ref_bf))}")

    print("KERNEL_OK")
</pallas_src>

<mosaic_0001>
module attributes {stable_mosaic.version = 11 : i64} {
  func.func @kernel(%arg0: i32, %arg1: memref<2x8x32xf32, #tpu.memory_space<vmem>>, %arg2: memref<4x32xf32, #tpu.memory_space<vmem>>, %arg3: memref<16x32xf32, #tpu.memory_space<vmem>>, %arg4: memref<32x32xf32, #tpu.memory_space<vmem>>, %arg5: memref<8x32xf32, #tpu.memory_space<vmem>>, %arg6: memref<4x32xf32, #tpu.memory_space<vmem>>, %arg7: memref<1x2x128xf32, #tpu.memory_space<vmem>>) attributes {dimension_semantics = [#tpu.dimension_semantics<parallel>], iteration_bounds = array<i64: 1>, scalar_prefetch = 0 : i64, scratch_operands = 0 : i64, tpu.core_type = #tpu.core_type<tc>, window_params = [{transform_indices = @transform_0, window_bounds = array<i64: 2, 8, 32>}, {pipeline_mode = #tpu.pipeline_mode<synchronous>, transform_indices = @transform_1, window_bounds = array<i64: 4, 32>}, {pipeline_mode = #tpu.pipeline_mode<synchronous>, transform_indices = @transform_2, window_bounds = array<i64: 16, 32>}, {pipeline_mode = #tpu.pipeline_mode<synchronous>, transform_indices = @transform_3, window_bounds = array<i64: 32, 32>}, {pipeline_mode = #tpu.pipeline_mode<synchronous>, transform_indices = @transform_4, window_bounds = array<i64: 8, 32>}, {pipeline_mode = #tpu.pipeline_mode<synchronous>, transform_indices = @transform_5, window_bounds = array<i64: 4, 32>}, {transform_indices = @transform_6, window_bounds = array<i64: 1, 2, 128>}]} {
    %c0 = arith.constant 0 : index
    %c0_0 = arith.constant 0 : index
    %c0_1 = arith.constant 0 : index
    %0 = vector.load %arg1[%c0, %c0_0, %c0_1] : memref<2x8x32xf32, #tpu.memory_space<vmem>>, vector<2x8x32xf32>
    %c0_2 = arith.constant 0 : index
    %c0_3 = arith.constant 0 : index
    %1 = vector.load %arg3[%c0_2, %c0_3] : memref<16x32xf32, #tpu.memory_space<vmem>>, vector<16x32xf32>
    %2 = vector.extract_strided_slice %1 {offsets = [0, 0], sizes = [1, 32], strides = [1, 1]} : vector<16x32xf32> to vector<1x32xf32>
    %3 = vector.extract_strided_slice %1 {offsets = [1, 0], sizes = [1, 32], strides = [1, 1]} : vector<16x32xf32> to vector<1x32xf32>
    %4 = vector.extract_strided_slice %1 {offsets = [2, 0], sizes = [1, 32], strides = [1, 1]} : vector<16x32xf32> to vector<1x32xf32>
    %5 = vector.extract_strided_slice %1 {offsets = [3, 0], sizes = [1, 32], strides = [1, 1]} : vector<16x32xf32> to vector<1x32xf32>
    %6 = vector.extract_strided_slice %1 {offsets = [4, 0], sizes = [1, 32], strides = [1, 1]} : vector<16x32xf32> to vector<1x32xf32>
    %7 = vector.extract_strided_slice %1 {offsets = [5, 0], sizes = [1, 32], strides = [1, 1]} : vector<16x32xf32> to vector<1x32xf32>
    %8 = vector.extract_strided_slice %1 {offsets = [6, 0], sizes = [1, 32], strides = [1, 1]} : vector<16x32xf32> to vector<1x32xf32>
    %9 = vector.extract_strided_slice %1 {offsets = [7, 0], sizes = [1, 32], strides = [1, 1]} : vector<16x32xf32> to vector<1x32xf32>
    %10 = vector.extract_strided_slice %1 {offsets = [8, 0], sizes = [1, 32], strides = [1, 1]} : vector<16x32xf32> to vector<1x32xf32>
    %11 = vector.extract_strided_slice %1 {offsets = [9, 0], sizes = [1, 32], strides = [1, 1]} : vector<16x32xf32> to vector<1x32xf32>
    %12 = vector.extract_strided_slice %1 {offsets = [10, 0], sizes = [1, 32], strides = [1, 1]} : vector<16x32xf32> to vector<1x32xf32>
    %13 = vector.extract_strided_slice %1 {offsets = [11, 0], sizes = [1, 32], strides = [1, 1]} : vector<16x32xf32> to vector<1x32xf32>
    %14 = vector.shape_cast %0 : vector<2x8x32xf32> to vector<16x32xf32>
    %cst = arith.constant dense<0.000000e+00> : vector<16xf32>
    %15 = vector.multi_reduction <add>, %14, %cst [1] : vector<16x32xf32> to vector<16xf32>
    %16 = vector.shape_cast %15 : vector<16xf32> to vector<16x1xf32>
    %cst_4 = arith.constant 3.200000e+01 : f32
    %17 = vector.broadcast %cst_4 : f32 to vector<16x1xf32>
    %18 = arith.divf %16, %17 : vector<16x1xf32>
    %19 = vector.broadcast %18 : vector<16x1xf32> to vector<16x32xf32>
    %20 = arith.subf %14, %19 : vector<16x32xf32>
    %21 = arith.mulf %20, %20 : vector<16x32xf32>
    %cst_5 = arith.constant dense<0.000000e+00> : vector<16xf32>
    %22 = vector.multi_reduction <add>, %21, %cst_5 [1] : vector<16x32xf32> to vector<16xf32>
    %23 = vector.shape_cast %22 : vector<16xf32> to vector<16x1xf32>
    %cst_6 = arith.constant 3.200000e+01 : f32
    %24 = vector.broadcast %cst_6 : f32 to vector<16x1xf32>
    %25 = arith.divf %23, %24 : vector<16x1xf32>
    %26 = vector.broadcast %18 : vector<16x1xf32> to vector<16x32xf32>
    %27 = arith.subf %14, %26 : vector<16x32xf32>
    %cst_7 = arith.constant 9.99999996E-13 : f32
    %28 = vector.broadcast %cst_7 : f32 to vector<16x1xf32>
    %29 = arith.addf %25, %28 : vector<16x1xf32>
    %30 = math.rsqrt %29 : vector<16x1xf32>
    %31 = vector.broadcast %30 : vector<16x1xf32> to vector<16x32xf32>
    %32 = arith.mulf %27, %31 : vector<16x32xf32>
    %33 = vector.broadcast %2 : vector<1x32xf32> to vector<16x32xf32>
    %34 = arith.mulf %33, %32 : vector<16x32xf32>
    %35 = vector.broadcast %3 : vector<1x32xf32> to vector<16x32xf32>
    %36 = arith.addf %34, %35 : vector<16x32xf32>
    %c0_8 = arith.constant 0 : index
    %c0_9 = arith.constant 0 : index
    %37 = vector.load %arg2[%c0_8, %c0_9] : memref<4x32xf32, #tpu.memory_space<vmem>>, vector<4x32xf32>
    %cst_10 = arith.constant dense<0.000000e+00> : vector<4xf32>
    %38 = vector.multi_reduction <add>, %37, %cst_10 [1] : vector<4x32xf32> to vector<4xf32>
    %39 = vector.shape_cast %38 : vector<4xf32> to vector<4x1xf32>
    %cst_11 = arith.constant 3.200000e+01 : f32
    %40 = vector.broadcast %cst_11 : f32 to vector<4x1xf32>
    %41 = arith.divf %39, %40 : vector<4x1xf32>
    %42 = vector.broadcast %41 : vector<4x1xf32> to vector<4x32xf32>
    %43 = arith.subf %37, %42 : vector<4x32xf32>
    %44 = arith.mulf %43, %43 : vector<4x32xf32>
    %cst_12 = arith.constant dense<0.000000e+00> : vector<4xf32>
    %45 = vector.multi_reduction <add>, %44, %cst_12 [1] : vector<4x32xf32> to vector<4xf32>
    %46 = vector.shape_cast %45 : vector<4xf32> to vector<4x1xf32>
    %cst_13 = arith.constant 3.200000e+01 : f32
    %47 = vector.broadcast %cst_13 : f32 to vector<4x1xf32>
    %48 = arith.divf %46, %47 : vector<4x1xf32>
    %49 = vector.broadcast %41 : vector<4x1xf32> to vector<4x32xf32>
    %50 = arith.subf %37, %49 : vector<4x32xf32>
    %cst_14 = arith.constant 9.99999996E-13 : f32
    %51 = vector.broadcast %cst_14 : f32 to vector<4x1xf32>
    %52 = arith.addf %48, %51 : vector<4x1xf32>
    %53 = math.rsqrt %52 : vector<4x1xf32>
    %54 = vector.broadcast %53 : vector<4x1xf32> to vector<4x32xf32>
    %55 = arith.mulf %50, %54 : vector<4x32xf32>
    %56 = vector.broadcast %4 : vector<1x32xf32> to vector<4x32xf32>
    %57 = arith.mulf %56, %55 : vector<4x32xf32>
    %58 = vector.broadcast %5 : vector<1x32xf32> to vector<4x32xf32>
    %59 = arith.addf %57, %58 : vector<4x32xf32>
    %60 = arith.mulf %36, %36 : vector<16x32xf32>
    %cst_15 = arith.constant dense<0.000000e+00> : vector<16xf32>
    %61 = vector.multi_reduction <add>, %60, %cst_15 [1] : vector<16x32xf32> to vector<16xf32>
    %62 = vector.shape_cast %61 : vector<16xf32> to vector<16x1xf32>
    %cst_16 = arith.constant 9.99999996E-13 : f32
    %63 = vector.broadcast %cst_16 : f32 to vector<16x1xf32>
    %64 = arith.maximumf %62, %63 : vector<16x1xf32>
    %65 = math.rsqrt %64 : vector<16x1xf32>
    %66 = vector.broadcast %65 : vector<16x1xf32> to vector<16x32xf32>
    %67 = arith.mulf %36, %66 : vector<16x32xf32>
    %68 = arith.mulf %59, %59 : vector<4x32xf32>
    %cst_17 = arith.constant dense<0.000000e+00> : vector<4xf32>
    %69 = vector.multi_reduction <add>, %68, %cst_17 [1] : vector<4x32xf32> to vector<4xf32>
    %70 = vector.shape_cast %69 : vector<4xf32> to vector<4x1xf32>
    %cst_18 = arith.constant 9.99999996E-13 : f32
    %71 = vector.broadcast %cst_18 : f32 to vector<4x1xf32>
    %72 = arith.maximumf %70, %71 : vector<4x1xf32>
    %73 = math.rsqrt %72 : vector<4x1xf32>
    %74 = vector.broadcast %73 : vector<4x1xf32> to vector<4x32xf32>
    %75 = arith.mulf %59, %74 : vector<4x32xf32>
    %cst_19 = arith.constant dense<0.000000e+00> : vector<16x4xf32>
    %76 = tpu.matmul %67, %75, %cst_19 {dimension_numbers = #tpu.dot_dimension_numbers<[1], [1], [0], [0], [0, 0, 1, 0], [], []>} : vector<16x32xf32>, vector<4x32xf32>, vector<16x4xf32> -> vector<16x4xf32>
    %cst_20 = arith.constant 0.176776692 : f32
    %77 = vector.broadcast %cst_20 : f32 to vector<16x4xf32>
    %78 = arith.mulf %76, %77 : vector<16x4xf32>
    %79 = math.exp %78 : vector<16x4xf32>
    %80 = vector.shape_cast %79 : vector<16x4xf32> to vector<2x8x4xf32>
    %cst_21 = arith.constant dense<0.000000e+00> : vector<2x8xf32>
    %81 = vector.multi_reduction <add>, %80, %cst_21 [2] : vector<2x8x4xf32> to vector<2x8xf32>
    %82 = vector.shape_cast %81 : vector<2x8xf32> to vector<2x8x1xf32>
    %c0_22 = arith.constant 0 : index
    %c0_23 = arith.constant 0 : index
    %83 = vector.load %arg5[%c0_22, %c0_23] : memref<8x32xf32, #tpu.memory_space<vmem>>, vector<8x32xf32>
    %84 = vector.shape_cast %83 : vector<8x32xf32> to vector<1x8x32xf32>
    %85 = vector.broadcast %84 : vector<1x8x32xf32> to vector<2x8x32xf32>
    %86 = arith.addf %0, %85 : vector<2x8x32xf32>
    %87 = vector.shape_cast %86 : vector<2x8x32xf32> to vector<16x32xf32>
    %cst_24 = arith.constant dense<0.000000e+00> : vector<16xf32>
    %88 = vector.multi_reduction <add>, %87, %cst_24 [1] : vector<16x32xf32> to vector<16xf32>
    %89 = vector.shape_cast %88 : vector<16xf32> to vector<16x1xf32>
    %cst_25 = arith.constant 3.200000e+01 : f32
    %90 = vector.broadcast %cst_25 : f32 to vector<16x1xf32>
    %91 = arith.divf %89, %90 : vector<16x1xf32>
    %92 = vector.broadcast %91 : vector<16x1xf32> to vector<16x32xf32>
    %93 = arith.subf %87, %92 : vector<16x32xf32>
    %94 = arith.mulf %93, %93 : vector<16x32xf32>
    %cst_26 = arith.constant dense<0.000000e+00> : vector<16xf32>
    %95 = vector.multi_reduction <add>, %94, %cst_26 [1] : vector<16x32xf32> to vector<16xf32>
    %96 = vector.shape_cast %95 : vector<16xf32> to vector<16x1xf32>
    %cst_27 = arith.constant 3.200000e+01 : f32
    %97 = vector.broadcast %cst_27 : f32 to vector<16x1xf32>
    %98 = arith.divf %96, %97 : vector<16x1xf32>
    %99 = vector.broadcast %91 : vector<16x1xf32> to vector<16x32xf32>
    %100 = arith.subf %87, %99 : vector<16x32xf32>
    %cst_28 = arith.constant 9.99999996E-13 : f32
    %101 = vector.broadcast %cst_28 : f32 to vector<16x1xf32>
    %102 = arith.addf %98, %101 : vector<16x1xf32>
    %103 = math.rsqrt %102 : vector<16x1xf32>
    %104 = vector.broadcast %103 : vector<16x1xf32> to vector<16x32xf32>
    %105 = arith.mulf %100, %104 : vector<16x32xf32>
    %106 = vector.broadcast %6 : vector<1x32xf32> to vector<16x32xf32>
    %107 = arith.mulf %106, %105 : vector<16x32xf32>
    %108 = vector.broadcast %7 : vector<1x32xf32> to vector<16x32xf32>
    %109 = arith.addf %107, %108 : vector<16x32xf32>
    %c0_29 = arith.constant 0 : index
    %c0_30 = arith.constant 0 : index
    %110 = vector.load %arg4[%c0_29, %c0_30] : memref<32x32xf32, #tpu.memory_space<vmem>>, vector<32x32xf32>
    %cst_31 = arith.constant dense<0.000000e+00> : vector<16x32xf32>
    %111 = tpu.matmul %109, %110, %cst_31 {dimension_numbers = #tpu.dot_dimension_numbers<[1], [0], [0], [1], [0, 0, 1, 1], [], []>} : vector<16x32xf32>, vector<32x32xf32>, vector<16x32xf32> -> vector<16x32xf32>
    %112 = vector.broadcast %12 : vector<1x32xf32> to vector<16x32xf32>
    %113 = arith.addf %111, %112 : vector<16x32xf32>
    %cst_32 = arith.constant 0.000000e+00 : f32
    %114 = vector.broadcast %cst_32 : f32 to vector<16x32xf32>
    %115 = arith.maximumf %113, %114 : vector<16x32xf32>
    %116 = arith.addf %109, %115 : vector<16x32xf32>
    %117 = vector.extract_strided_slice %83 {offsets = [7, 0], sizes = [1, 32], strides = [1, 1]} : vector<8x32xf32> to vector<1x32xf32>
    %118 = arith.addf %13, %117 : vector<1x32xf32>
    %119 = vector.extract_strided_slice %0 {offsets = [0, 7, 0], sizes = [2, 1, 32], strides = [1, 1, 1]} : vector<2x8x32xf32> to vector<2x1x32xf32>
    %120 = vector.shape_cast %119 : vector<2x1x32xf32> to vector<2x32xf32>
    %121 = vector.broadcast %118 : vector<1x32xf32> to vector<2x32xf32>
    %122 = arith.addf %121, %120 : vector<2x32xf32>
    %cst_33 = arith.constant dense<0.000000e+00> : vector<2xf32>
    %123 = vector.multi_reduction <add>, %122, %cst_33 [1] : vector<2x32xf32> to vector<2xf32>
    %124 = vector.shape_cast %123 : vector<2xf32> to vector<2x1xf32>
    %cst_34 = arith.constant 3.200000e+01 : f32
    %125 = vector.broadcast %cst_34 : f32 to vector<2x1xf32>
    %126 = arith.divf %124, %125 : vector<2x1xf32>
    %127 = vector.broadcast %126 : vector<2x1xf32> to vector<2x32xf32>
    %128 = arith.subf %122, %127 : vector<2x32xf32>
    %129 = arith.mulf %128, %128 : vector<2x32xf32>
    %cst_35 = arith.constant dense<0.000000e+00> : vector<2xf32>
    %130 = vector.multi_reduction <add>, %129, %cst_35 [1] : vector<2x32xf32> to vector<2xf32>
    %131 = vector.shape_cast %130 : vector<2xf32> to vector<2x1xf32>
    %cst_36 = arith.constant 3.200000e+01 : f32
    %132 = vector.broadcast %cst_36 : f32 to vector<2x1xf32>
    %133 = arith.divf %131, %132 : vector<2x1xf32>
    %134 = vector.broadcast %126 : vector<2x1xf32> to vector<2x32xf32>
    %135 = arith.subf %122, %134 : vector<2x32xf32>
    %cst_37 = arith.constant 9.99999996E-13 : f32
    %136 = vector.broadcast %cst_37 : f32 to vector<2x1xf32>
    %137 = arith.addf %133, %136 : vector<2x1xf32>
    %138 = math.rsqrt %137 : vector<2x1xf32>
    %139 = vector.broadcast %138 : vector<2x1xf32> to vector<2x32xf32>
    %140 = arith.mulf %135, %139 : vector<2x32xf32>
    %141 = vector.broadcast %8 : vector<1x32xf32> to vector<2x32xf32>
    %142 = arith.mulf %141, %140 : vector<2x32xf32>
    %143 = vector.broadcast %9 : vector<1x32xf32> to vector<2x32xf32>
    %144 = arith.addf %142, %143 : vector<2x32xf32>
    %145 = vector.shape_cast %116 : vector<16x32xf32> to vector<2x8x32xf32>
    %146 = vector.shape_cast %144 : vector<2x32xf32> to vector<2x1x32xf32>
    %147 = vector.broadcast %146 : vector<2x1x32xf32> to vector<2x8x32xf32>
    %148 = arith.mulf %145, %147 : vector<2x8x32xf32>
    %cst_38 = arith.constant dense<0.000000e+00> : vector<2x8xf32>
    %149 = vector.multi_reduction <add>, %148, %cst_38 [2] : vector<2x8x32xf32> to vector<2x8xf32>
    %150 = vector.shape_cast %149 : vector<2x8xf32> to vector<2x8x1xf32>
    %cst_39 = arith.constant 0.176776692 : f32
    %151 = vector.broadcast %cst_39 : f32 to vector<2x8x1xf32>
    %152 = arith.mulf %150, %151 : vector<2x8x1xf32>
    %cst_40 = arith.constant dense<0xFF800000> : vector<2x1xf32>
    %153 = vector.multi_reduction <maximumf>, %152, %cst_40 [1] : vector<2x8x1xf32> to vector<2x1xf32>
    %154 = vector.shape_cast %153 : vector<2x1xf32> to vector<2x1x1xf32>
    %155 = vector.broadcast %154 : vector<2x1x1xf32> to vector<2x8x1xf32>
    %156 = arith.subf %152, %155 : vector<2x8x1xf32>
    %157 = math.exp %156 : vector<2x8x1xf32>
    %cst_41 = arith.constant dense<0.000000e+00> : vector<2x1xf32>
    %158 = vector.multi_reduction <add>, %157, %cst_41 [1] : vector<2x8x1xf32> to vector<2x1xf32>
    %159 = vector.shape_cast %158 : vector<2x1xf32> to vector<2x1x1xf32>
    %160 = tpu.reciprocal %82 : vector<2x8x1xf32> -> vector<2x8x1xf32>
    %161 = arith.mulf %157, %160 : vector<2x8x1xf32>
    %162 = tpu.reciprocal %159 : vector<2x1x1xf32> -> vector<2x1x1xf32>
    %163 = vector.broadcast %162 : vector<2x1x1xf32> to vector<2x8x1xf32>
    %164 = arith.mulf %161, %163 : vector<2x8x1xf32>
    %165 = vector.broadcast %164 : vector<2x8x1xf32> to vector<2x8x4xf32>
    %166 = arith.mulf %80, %165 : vector<2x8x4xf32>
    %c0_42 = arith.constant 0 : index
    %c0_43 = arith.constant 0 : index
    %167 = vector.load %arg6[%c0_42, %c0_43] : memref<4x32xf32, #tpu.memory_space<vmem>>, vector<4x32xf32>
    %168 = vector.extract_strided_slice %166 {offsets = [0, 0, 0], sizes = [2, 8, 1], strides = [1, 1, 1]} : vector<2x8x4xf32> to vector<2x8x1xf32>
    %169 = vector.broadcast %168 : vector<2x8x1xf32> to vector<2x8x32xf32>
    %170 = arith.mulf %169, %0 : vector<2x8x32xf32>
    %cst_44 = arith.constant dense<0.000000e+00> : vector<2x32xf32>
    %171 = vector.multi_reduction <add>, %170, %cst_44 [1] : vector<2x8x32xf32> to vector<2x32xf32>
    %172 = vector.extract_strided_slice %167 {offsets = [0, 0], sizes = [1, 32], strides = [1, 1]} : vector<4x32xf32> to vector<1x32xf32>
    %173 = vector.broadcast %172 : vector<1x32xf32> to vector<2x32xf32>
    %174 = arith.addf %173, %171 : vector<2x32xf32>
    %cst_45 = arith.constant dense<0.000000e+00> : vector<2xf32>
    %175 = vector.multi_reduction <add>, %174, %cst_45 [1] : vector<2x32xf32> to vector<2xf32>
    %176 = vector.shape_cast %175 : vector<2xf32> to vector<2x1xf32>
    %cst_46 = arith.constant 3.200000e+01 : f32
    %177 = vector.broadcast %cst_46 : f32 to vector<2x1xf32>
    %178 = arith.divf %176, %177 : vector<2x1xf32>
    %179 = vector.broadcast %178 : vector<2x1xf32> to vector<2x32xf32>
    %180 = arith.subf %174, %179 : vector<2x32xf32>
    %181 = arith.mulf %180, %180 : vector<2x32xf32>
    %cst_47 = arith.constant dense<0.000000e+00> : vector<2xf32>
    %182 = vector.multi_reduction <add>, %181, %cst_47 [1] : vector<2x32xf32> to vector<2xf32>
    %183 = vector.shape_cast %182 : vector<2xf32> to vector<2x1xf32>
    %cst_48 = arith.constant 3.200000e+01 : f32
    %184 = vector.broadcast %cst_48 : f32 to vector<2x1xf32>
    %185 = arith.divf %183, %184 : vector<2x1xf32>
    %186 = vector.broadcast %178 : vector<2x1xf32> to vector<2x32xf32>
    %187 = arith.subf %174, %186 : vector<2x32xf32>
    %cst_49 = arith.constant 9.99999996E-13 : f32
    %188 = vector.broadcast %cst_49 : f32 to vector<2x1xf32>
    %189 = arith.addf %185, %188 : vector<2x1xf32>
    %190 = math.rsqrt %189 : vector<2x1xf32>
    %191 = vector.broadcast %190 : vector<2x1xf32> to vector<2x32xf32>
    %192 = arith.mulf %187, %191 : vector<2x32xf32>
    %193 = vector.broadcast %10 : vector<1x32xf32> to vector<2x32xf32>
    %194 = arith.mulf %193, %192 : vector<2x32xf32>
    %195 = vector.broadcast %11 : vector<1x32xf32> to vector<2x32xf32>
    %196 = arith.addf %194, %195 : vector<2x32xf32>
    %197 = vector.extract_strided_slice %166 {offsets = [0, 0, 1], sizes = [2, 8, 1], strides = [1, 1, 1]} : vector<2x8x4xf32> to vector<2x8x1xf32>
    %198 = vector.broadcast %197 : vector<2x8x1xf32> to vector<2x8x32xf32>
    %199 = arith.mulf %198, %0 : vector<2x8x32xf32>
    %cst_50 = arith.constant dense<0.000000e+00> : vector<2x32xf32>
    %200 = vector.multi_reduction <add>, %199, %cst_50 [1] : vector<2x8x32xf32> to vector<2x32xf32>
    %201 = vector.extract_strided_slice %167 {offsets = [1, 0], sizes = [1, 32], strides = [1, 1]} : vector<4x32xf32> to vector<1x32xf32>
    %202 = vector.broadcast %201 : vector<1x32xf32> to vector<2x32xf32>
    %203 = arith.addf %202, %200 : vector<2x32xf32>
    %cst_51 = arith.constant dense<0.000000e+00> : vector<2xf32>
    %204 = vector.multi_reduction <add>, %203, %cst_51 [1] : vector<2x32xf32> to vector<2xf32>
    %205 = vector.shape_cast %204 : vector<2xf32> to vector<2x1xf32>
    %cst_52 = arith.constant 3.200000e+01 : f32
    %206 = vector.broadcast %cst_52 : f32 to vector<2x1xf32>
    %207 = arith.divf %205, %206 : vector<2x1xf32>
    %208 = vector.broadcast %207 : vector<2x1xf32> to vector<2x32xf32>
    %209 = arith.subf %203, %208 : vector<2x32xf32>
    %210 = arith.mulf %209, %209 : vector<2x32xf32>
    %cst_53 = arith.constant dense<0.000000e+00> : vector<2xf32>
    %211 = vector.multi_reduction <add>, %210, %cst_53 [1] : vector<2x32xf32> to vector<2xf32>
    %212 = vector.shape_cast %211 : vector<2xf32> to vector<2x1xf32>
    %cst_54 = arith.constant 3.200000e+01 : f32
    %213 = vector.broadcast %cst_54 : f32 to vector<2x1xf32>
    %214 = arith.divf %212, %213 : vector<2x1xf32>
    %215 = vector.broadcast %207 : vector<2x1xf32> to vector<2x32xf32>
    %216 = arith.subf %203, %215 : vector<2x32xf32>
    %cst_55 = arith.constant 9.99999996E-13 : f32
    %217 = vector.broadcast %cst_55 : f32 to vector<2x1xf32>
    %218 = arith.addf %214, %217 : vector<2x1xf32>
    %219 = math.rsqrt %218 : vector<2x1xf32>
    %220 = vector.broadcast %219 : vector<2x1xf32> to vector<2x32xf32>
    %221 = arith.mulf %216, %220 : vector<2x32xf32>
    %222 = vector.broadcast %10 : vector<1x32xf32> to vector<2x32xf32>
    %223 = arith.mulf %222, %221 : vector<2x32xf32>
    %224 = vector.broadcast %11 : vector<1x32xf32> to vector<2x32xf32>
    %225 = arith.addf %223, %224 : vector<2x32xf32>
    %226 = vector.extract_strided_slice %166 {offsets = [0, 0, 2], sizes = [2, 8, 1], strides = [1, 1, 1]} : vector<2x8x4xf32> to vector<2x8x1xf32>
    %227 = vector.broadcast %226 : vector<2x8x1xf32> to vector<2x8x32xf32>
    %228 = arith.mulf %227, %0 : vector<2x8x32xf32>
    %cst_56 = arith.constant dense<0.000000e+00> : vector<2x32xf32>
    %229 = vector.multi_reduction <add>, %228, %cst_56 [1] : vector<2x8x32xf32> to vector<2x32xf32>
    %230 = vector.extract_strided_slice %167 {offsets = [2, 0], sizes = [1, 32], strides = [1, 1]} : vector<4x32xf32> to vector<1x32xf32>
    %231 = vector.broadcast %230 : vector<1x32xf32> to vector<2x32xf32>
    %232 = arith.addf %231, %229 : vector<2x32xf32>
    %cst_57 = arith.constant dense<0.000000e+00> : vector<2xf32>
    %233 = vector.multi_reduction <add>, %232, %cst_57 [1] : vector<2x32xf32> to vector<2xf32>
    %234 = vector.shape_cast %233 : vector<2xf32> to vector<2x1xf32>
    %cst_58 = arith.constant 3.200000e+01 : f32
    %235 = vector.broadcast %cst_58 : f32 to vector<2x1xf32>
    %236 = arith.divf %234, %235 : vector<2x1xf32>
    %237 = vector.broadcast %236 : vector<2x1xf32> to vector<2x32xf32>
    %238 = arith.subf %232, %237 : vector<2x32xf32>
    %239 = arith.mulf %238, %238 : vector<2x32xf32>
    %cst_59 = arith.constant dense<0.000000e+00> : vector<2xf32>
    %240 = vector.multi_reduction <add>, %239, %cst_59 [1] : vector<2x32xf32> to vector<2xf32>
    %241 = vector.shape_cast %240 : vector<2xf32> to vector<2x1xf32>
    %cst_60 = arith.constant 3.200000e+01 : f32
    %242 = vector.broadcast %cst_60 : f32 to vector<2x1xf32>
    %243 = arith.divf %241, %242 : vector<2x1xf32>
    %244 = vector.broadcast %236 : vector<2x1xf32> to vector<2x32xf32>
    %245 = arith.subf %232, %244 : vector<2x32xf32>
    %cst_61 = arith.constant 9.99999996E-13 : f32
    %246 = vector.broadcast %cst_61 : f32 to vector<2x1xf32>
    %247 = arith.addf %243, %246 : vector<2x1xf32>
    %248 = math.rsqrt %247 : vector<2x1xf32>
    %249 = vector.broadcast %248 : vector<2x1xf32> to vector<2x32xf32>
    %250 = arith.mulf %245, %249 : vector<2x32xf32>
    %251 = vector.broadcast %10 : vector<1x32xf32> to vector<2x32xf32>
    %252 = arith.mulf %251, %250 : vector<2x32xf32>
    %253 = vector.broadcast %11 : vector<1x32xf32> to vector<2x32xf32>
    %254 = arith.addf %252, %253 : vector<2x32xf32>
    %255 = vector.extract_strided_slice %166 {offsets = [0, 0, 3], sizes = [2, 8, 1], strides = [1, 1, 1]} : vector<2x8x4xf32> to vector<2x8x1xf32>
    %256 = vector.broadcast %255 : vector<2x8x1xf32> to vector<2x8x32xf32>
    %257 = arith.mulf %256, %0 : vector<2x8x32xf32>
    %cst_62 = arith.constant dense<0.000000e+00> : vector<2x32xf32>
    %258 = vector.multi_reduction <add>, %257, %cst_62 [1] : vector<2x8x32xf32> to vector<2x32xf32>
    %259 = vector.extract_strided_slice %167 {offsets = [3, 0], sizes = [1, 32], strides = [1, 1]} : vector<4x32xf32> to vector<1x32xf32>
    %260 = vector.broadcast %259 : vector<1x32xf32> to vector<2x32xf32>
    %261 = arith.addf %260, %258 : vector<2x32xf32>
    %cst_63 = arith.constant dense<0.000000e+00> : vector<2xf32>
    %262 = vector.multi_reduction <add>, %261, %cst_63 [1] : vector<2x32xf32> to vector<2xf32>
    %263 = vector.shape_cast %262 : vector<2xf32> to vector<2x1xf32>
    %cst_64 = arith.constant 3.200000e+01 : f32
    %264 = vector.broadcast %cst_64 : f32 to vector<2x1xf32>
    %265 = arith.divf %263, %264 : vector<2x1xf32>
    %266 = vector.broadcast %265 : vector<2x1xf32> to vector<2x32xf32>
    %267 = arith.subf %261, %266 : vector<2x32xf32>
    %268 = arith.mulf %267, %267 : vector<2x32xf32>
    %cst_65 = arith.constant dense<0.000000e+00> : vector<2xf32>
    %269 = vector.multi_reduction <add>, %268, %cst_65 [1] : vector<2x32xf32> to vector<2xf32>
    %270 = vector.shape_cast %269 : vector<2xf32> to vector<2x1xf32>
    %cst_66 = arith.constant 3.200000e+01 : f32
    %271 = vector.broadcast %cst_66 : f32 to vector<2x1xf32>
    %272 = arith.divf %270, %271 : vector<2x1xf32>
    %273 = vector.broadcast %265 : vector<2x1xf32> to vector<2x32xf32>
    %274 = arith.subf %261, %273 : vector<2x32xf32>
    %cst_67 = arith.constant 9.99999996E-13 : f32
    %275 = vector.broadcast %cst_67 : f32 to vector<2x1xf32>
    %276 = arith.addf %272, %275 : vector<2x1xf32>
    %277 = math.rsqrt %276 : vector<2x1xf32>
    %278 = vector.broadcast %277 : vector<2x1xf32> to vector<2x32xf32>
    %279 = arith.mulf %274, %278 : vector<2x32xf32>
    %280 = vector.broadcast %10 : vector<1x32xf32> to vector<2x32xf32>
    %281 = arith.mulf %280, %279 : vector<2x32xf32>
    %282 = vector.broadcast %11 : vector<1x32xf32> to vector<2x32xf32>
    %283 = arith.addf %281, %282 : vector<2x32xf32>
    %284 = tpu.concatenate %196, %225, %254, %283 in 1 : vector<2x32xf32>, vector<2x32xf32>, vector<2x32xf32>, vector<2x32xf32> -> vector<2x128xf32>
    %c0_68 = arith.constant 0 : index
    %c0_69 = arith.constant 0 : index
    %c0_70 = arith.constant 0 : index
    %285 = vector.load %arg7[%c0_68, %c0_69, %c0_70] : memref<1x2x128xf32, #tpu.memory_space<vmem>>, vector<1x2x128xf32>
    %286 = vector.shape_cast %285 : vector<1x2x128xf32> to vector<2x128xf32>
    %287 = vector.shape_cast %284 : vector<2x128xf32> to vector<1x2x128xf32>
    tpu.vector_store %arg7[%c0_68, %c0_69, %c0_70], %287 {strides = array<i32>} : memref<1x2x128xf32, #tpu.memory_space<vmem>>, vector<1x2x128xf32>,
    return
  }
  func.func @transform_0(%arg0: i32) -> (i32, i32, i32) {
    %c0_i32 = arith.constant 0 : i32
    %c0_i32_0 = arith.constant 0 : i32
    %c0_i32_1 = arith.constant 0 : i32
    return %arg0, %c0_i32, %c0_i32_0 : i32, i32, i32
  }
  func.func @transform_1(%arg0: i32) -> (i32, i32) {
    %c0_i32 = arith.constant 0 : i32
    %c0_i32_0 = arith.constant 0 : i32
    %c0_i32_1 = arith.constant 0 : i32
    return %c0_i32, %c0_i32_0 : i32, i32
  }
  func.func @transform_2(%arg0: i32) -> (i32, i32) {
    %c0_i32 = arith.constant 0 : i32
    %c0_i32_0 = arith.constant 0 : i32
    %c0_i32_1 = arith.constant 0 : i32
    return %c0_i32, %c0_i32_0 : i32, i32
  }
  func.func @transform_3(%arg0: i32) -> (i32, i32) {
    %c0_i32 = arith.constant 0 : i32
    %c0_i32_0 = arith.constant 0 : i32
    %c0_i32_1 = arith.constant 0 : i32
    return %c0_i32, %c0_i32_0 : i32, i32
  }
  func.func @transform_4(%arg0: i32) -> (i32, i32) {
    %c0_i32 = arith.constant 0 : i32
    %c0_i32_0 = arith.constant 0 : i32
    %c0_i32_1 = arith.constant 0 : i32
    return %c0_i32, %c0_i32_0 : i32, i32
  }
  func.func @transform_5(%arg0: i32) -> (i32, i32) {
    %c0_i32 = arith.constant 0 : i32
    %c0_i32_0 = arith.constant 0 : i32
    %c0_i32_1 = arith.constant 0 : i32
    return %c0_i32, %c0_i32_0 : i32, i32
  }
  func.func @transform_6(%arg0: i32) -> (i32, i32, i32) {
    %c0_i32 = arith.constant 0 : i32
    %c0_i32_0 = arith.constant 0 : i32
    %c0_i32_1 = arith.constant 0 : i32
    return %arg0, %c0_i32, %c0_i32_0 : i32, i32, i32
  }
}

</mosaic_0001>

<llo_original>
// kernel: tpu_custom_call.1
$region0: #{tpu_custom_call.1}
  #allocation0 [shape = 'u32[]', space=smem, size = 0x4, offset = 0x4, fixed_abs, tag = 'smem constant byte address 0x4 - core index']
  #allocation1 [shape = 'u32[144,128]{1,0:T(1,128)}', space=vmem, size = 0x12000, scoped, tag = 'internal scratch']
  %s0 = inlined_call_operand.hbm [shape: f32[2,8,32], index: 0, kind: input, shape index: {}]
  %s1 = inlined_call_operand.hbm [shape: f32[4,32], index: 1, kind: input, shape index: {}]
  %s2 = inlined_call_operand.hbm [shape: f32[16,32], index: 2, kind: input, shape index: {}]
  %s3 = inlined_call_operand.hbm [shape: f32[32,32], index: 3, kind: input, shape index: {}]
  %s4 = inlined_call_operand.hbm [shape: f32[8,32], index: 4, kind: input, shape index: {}]
  %s5 = inlined_call_operand.vmem [shape: f32[4,32], index: 5, kind: input, shape index: {}]
  %s6 = inlined_call_operand.hbm [shape: f32[1,2,128], index: 6, kind: output, shape index: {}]
  %s7 = sld [smem:[#allocation0]]
  $region54: #{tpu_custom_call.1} parent=0
    _
  %s9 = ssub.s32 1, %s7
  %s10 = scalar_select 0, %s9, %s7
  $region1: #{tpu_custom_call.1} parent=0
    #allocation2 [shape = 'u8[8192]{0}', space=vmem, size = 0x2000, scoped, tag = 'input window, operand 0, single buffered']
    #allocation3 [shape = 's32[1]{0}', space=sflag, size = 0x4, scoped, tag = 'scoped memory for tpu_custom_call.1']
    #allocation4 [shape = 's32[1]{0}', space=sflag, size = 0x4, scoped, tag = 'scoped memory for tpu_custom_call.1']
    #allocation5 [shape = 'u8[2048]{0}', space=vmem, size = 0x800, scoped, tag = 'input window, operand 1, single buffered']
    #allocation6 [shape = 's32[1]{0}', space=sflag, size = 0x4, scoped, tag = 'scoped memory for tpu_custom_call.1']
    #allocation7 [shape = 'u8[8192]{0}', space=vmem, size = 0x2000, scoped, tag = 'input window, operand 2, single buffered']
    #allocation8 [shape = 'u8[16384]{0}', space=vmem, size = 0x4000, scoped, tag = 'input window, operand 3, single buffered']
    #allocation9 [shape = 's32[1]{0}', space=sflag, size = 0x4, scoped, tag = 'scoped memory for tpu_custom_call.1']
    #allocation10 [shape = 'u8[4096]{0}', space=vmem, size = 0x1000, scoped, tag = 'input window, operand 4, single buffered']
    #allocation11 [shape = 'u8[1024]{0}', space=vmem, size = 0x400, scoped, tag = 'output window, operand 0, single buffered']
    %11 = vsyncpa [#allocation3], 0
    %12 = vsyncpa [#allocation6], 0
    %13 = vsyncpa [#allocation9], 0
    %14 = vsyncpa [#allocation4], 0
    // Predicated region
    $region2: #{tpu_custom_call.1} parent=1 // pred_check
      _
    $region3: #{tpu_custom_call.1} parent=1 // pred_check_branch
      %16 = sbr.rel (0) target = $region5
    $region4: #{tpu_custom_call.1} parent=1 // pred_region
      %s18 = ssub.s32 256, 256
      %19 = vsyncadd [#allocation3], %s18
      %s20 = sshll.u32 [#allocation2], 4
      %s21 = int_to_ptr.vmem [resolvable:$true] %s20
      %26 = dma.hbm_to_vmem [thread:$0]  %s0, 256, %s21, [#allocation3], 128, 128, 8
    $region5: #{tpu_custom_call.1} parent=1 // pred_fallthru
      _
    // Predicated region
    $region6: #{tpu_custom_call.1} parent=1 // pred_check
      _
    $region7: #{tpu_custom_call.1} parent=1 // pred_check_branch
      %28 = sbr.rel (0) target = $region9
    $region8: #{tpu_custom_call.1} parent=1 // pred_region
      %s30 = ssub.s32 64, 64
      %31 = vsyncadd [#allocation6], %s30
      %s33 = sshll.u32 [#allocation5], 4
      %s34 = int_to_ptr.vmem [resolvable:$true] %s33
      %36 = dma.hbm_to_vmem [thread:$0]  %s1, 64, %s34, [#allocation6]
    $region9: #{tpu_custom_call.1} parent=1 // pred_fallthru
      _
    // Predicated region
    $region10: #{tpu_custom_call.1} parent=1 // pred_check
      _
    $region11: #{tpu_custom_call.1} parent=1 // pred_check_branch
      %38 = sbr.rel (0) target = $region13
    $region12: #{tpu_custom_call.1} parent=1 // pred_region
      %s40 = ssub.s32 256, 256
      %41 = vsyncadd [#allocation6], %s40
      %s42 = sshll.u32 [#allocation7], 4
      %s43 = int_to_ptr.vmem [resolvable:$true] %s42
      %48 = dma.hbm_to_vmem [thread:$0]  %s2, 256, %s43, [#allocation6], 128, 128, 8
    $region13: #{tpu_custom_call.1} parent=1 // pred_fallthru
      _
    // Predicated region
    $region14: #{tpu_custom_call.1} parent=1 // pred_check
      _
    $region15: #{tpu_custom_call.1} parent=1 // pred_check_branch
      %50 = sbr.rel (0) target = $region17
    $region16: #{tpu_custom_call.1} parent=1 // pred_region
      %s52 = ssub.s32 512, 512
      %53 = vsyncadd [#allocation9], %s52
      %s54 = sshll.u32 [#allocation8], 4
      %s55 = int_to_ptr.vmem [resolvable:$true] %s54
      %60 = dma.hbm_to_vmem [thread:$0]  %s3, 512, %s55, [#allocation9], 128, 128, 8
    $region17: #{tpu_custom_call.1} parent=1 // pred_fallthru
      _
    // Predicated region
    $region18: #{tpu_custom_call.1} parent=1 // pred_check
      _
    $region19: #{tpu_custom_call.1} parent=1 // pred_check_branch
      %62 = sbr.rel (0) target = $region21
    $region20: #{tpu_custom_call.1} parent=1 // pred_region
      %s64 = ssub.s32 128, 128
      %65 = vsyncadd [#allocation9], %s64
      %s67 = sshll.u32 [#allocation10], 4
      %s68 = int_to_ptr.vmem [resolvable:$true] %s67
      %70 = dma.hbm_to_vmem [thread:$0]  %s4, 128, %s68, [#allocation9]
    $region21: #{tpu_custom_call.1} parent=1 // pred_fallthru
      _
    // Predicated region
    $region22: #{tpu_custom_call.1} parent=1 // pred_check
      _
    $region23: #{tpu_custom_call.1} parent=1 // pred_check_branch
      %72 = sbr.rel (0) target = $region25
    $region24: #{tpu_custom_call.1} parent=1 // pred_region
      _
    $region25: #{tpu_custom_call.1} parent=1 // pred_fallthru
      _
    // Predicated region
    $region26: #{tpu_custom_call.1} parent=1 // pred_check
      _
    $region27: #{tpu_custom_call.1} parent=1 // pred_check_branch
      %74 = sbr.rel (0) target = $region29
    $region28: #{tpu_custom_call.1} parent=1 // pred_region
      %75 = dma.done [#allocation3], 256
    $region29: #{tpu_custom_call.1} parent=1 // pred_fallthru
      _
    // Predicated region
    $region30: #{tpu_custom_call.1} parent=1 // pred_check
      _
    $region31: #{tpu_custom_call.1} parent=1 // pred_check_branch
      %77 = sbr.rel (0) target = $region33
    $region32: #{tpu_custom_call.1} parent=1 // pred_region
      %78 = dma.done [#allocation6], 64
    $region33: #{tpu_custom_call.1} parent=1 // pred_fallthru
      _
    // Predicated region
    $region34: #{tpu_custom_call.1} parent=1 // pred_check
      _
    $region35: #{tpu_custom_call.1} parent=1 // pred_check_branch
      %80 = sbr.rel (0) target = $region37
    $region36: #{tpu_custom_call.1} parent=1 // pred_region
      %81 = dma.done [#allocation6], 256
    $region37: #{tpu_custom_call.1} parent=1 // pred_fallthru
      _
    // Predicated region
    $region38: #{tpu_custom_call.1} parent=1 // pred_check
      _
    $region39: #{tpu_custom_call.1} parent=1 // pred_check_branch
      %83 = sbr.rel (0) target = $region41
    $region40: #{tpu_custom_call.1} parent=1 // pred_region
      %84 = dma.done [#allocation9], 512
    $region41: #{tpu_custom_call.1} parent=1 // pred_fallthru
      _
    // Predicated region
    $region42: #{tpu_custom_call.1} parent=1 // pred_check
      _
    $region43: #{tpu_custom_call.1} parent=1 // pred_check_branch
      %86 = sbr.rel (0) target = $region45
    $region44: #{tpu_custom_call.1} parent=1 // pred_region
      %87 = dma.done [#allocation9], 128
    $region45: #{tpu_custom_call.1} parent=1 // pred_fallthru
      _
    %v88 = vld [vmem:[#allocation2] sm:$0xff]
    %v89 = vld [vmem:[#allocation2 + $0x8] sm:$0xff]
    %v90 = vld [vmem:[#allocation7] sm:$0xff]
    %v91 = vld [vmem:[#allocation7 + $0x8] sm:$0xff]
    %vm92 = vcmask 261120
    %v93 = vsel %vm92, %v88, 0.0
    %94 = vadd.xlane.f32.xlu0 %v93
    %v95 = vpop.xlane.xlu0 %94
    %v96 = vsel %vm92, %v89, 0.0
    %97 = vadd.xlane.f32.xlu0 %v96
    %v98 = vpop.xlane.xlu0 %97
    %v99 = vrcp.pop 32.0
    %v100 = vmul.f32 %v95, %v99
    %v101 = vmul.f32 %v98, %v99
    %v102 = vsub.f32 %v88, %v100
    %v103 = vsub.f32 %v89, %v101
    %v104 = vmul.f32 %v102, %v102
    %v105 = vmul.f32 %v103, %v103
    %v106 = vsel %vm92, %v104, 0.0
    %107 = vadd.xlane.f32.xlu0 %v106
    %v108 = vpop.xlane.xlu0 %107
    %v109 = vsel %vm92, %v105, 0.0
    %110 = vadd.xlane.f32.xlu0 %v109
    %v111 = vpop.xlane.xlu0 %110
    %v112 = vmul.f32 %v108, %v99
    %v113 = vmul.f32 %v111, %v99
    %v114 = vadd.f32 %v112, 1e-12
    %v115 = vadd.f32 %v113, 1e-12
    %v116 = vrsqrt.pop %v114
    %v117 = vrsqrt.pop %v115
    %v118 = vmul.f32 %v102, %v116
    %v119 = vmul.f32 %v103, %v117
    %v120 = vlaneseq
    %v121 = vshrl.u32 %v120, 7
    %v122 = vsub.s32 0, %v121
    %v123 = vrot.slane %v90, %v122
    %v124 = vmul.f32 %v123, %v118
    %v125 = vmul.f32 %v123, %v119
    %v126 = vlaneseq
    %v127 = vshrl.u32 %v126, 7
    %v128 = vsub.s32 1, %v127
    %v129 = vrot.slane %v90, %v128
    %v130 = vadd.f32 %v124, %v129
    %v131 = vadd.f32 %v125, %v129
    %v132 = vld [vmem:[#allocation5] sm:$0xf]
    %vm133 = vcmask 257024
    %v134 = vsel %vm133, %v132, 0.0
    %135 = vadd.xlane.f32.xlu0 %v134
    %v136 = vpop.xlane.xlu0 %135
    %v137 = vmul.f32 %v136, %v99
    %v138 = vsub.f32 %v132, %v137
    %v139 = vmul.f32 %v138, %v138
    %v140 = vsel %vm133, %v139, 0.0
    %141 = vadd.xlane.f32.xlu0 %v140
    %v142 = vpop.xlane.xlu0 %141
    %v143 = vmul.f32 %v142, %v99
    %v144 = vadd.f32 %v143, 1e-12
    %v145 = vrsqrt.pop %v144
    %v146 = vmul.f32 %v138, %v145
    %v147 = vlaneseq
    %v148 = vshrl.u32 %v147, 7
    %v149 = vsub.s32 2, %v148
    %v150 = vrot.slane %v90, %v149
    %v151 = vmul.f32 %v150, %v146
    %v152 = vlaneseq
    %v153 = vshrl.u32 %v152, 7
    %v154 = vsub.s32 3, %v153
    %v155 = vrot.slane %v90, %v154
    %v156 = vadd.f32 %v151, %v155
    %v157 = vmul.f32 %v130, %v130
    %v158 = vmul.f32 %v131, %v131
    %v159 = vsel %vm92, %v157, 0.0
    %160 = vadd.xlane.f32.xlu0 %v159
    %v161 = vpop.xlane.xlu0 %160
    %v162 = vsel %vm92, %v158, 0.0
    %163 = vadd.xlane.f32.xlu0 %v162
    %v164 = vpop.xlane.xlu0 %163
    %v165 = vmax.f32 %v161, 1e-12
    %v166 = vmax.f32 %v164, 1e-12
    %v167 = vrsqrt.pop %v165
    %v168 = vrsqrt.pop %v166
    %v169 = vmul.f32 %v130, %v167
    %v170 = vmul.f32 %v131, %v168
    %v171 = vmul.f32 %v156, %v156
    %v172 = vsel %vm133, %v171, 0.0
    %173 = vadd.xlane.f32.xlu0 %v172
    %v174 = vpop.xlane.xlu0 %173
    %v175 = vmax.f32 %v174, 1e-12
    %v176 = vrsqrt.pop %v175
    %v177 = vmul.f32 %v156, %v176
    %v179 = vsel %vm92, %v169, 0
    %v182 = vsel %vm92, %v170, 0
    %v185 = vsel %vm92, %v177, 0
    %187 = vmatprep.subr.mxu0 0.0
    %188 = vmatpush1.xpose.msra.mxu0 0.0
    %189 = vmatprep.subr.mxu0 0.0
    %190 = vmatpush1.xpose.msra.mxu0 0.0
    %191 = vmatprep.subr.mxu0 0.0
    %192 = vmatpush1.xpose.msra.mxu0 0.0
    %193 = vmatprep.subr.mxu0 0.0
    %194 = vmatpush1.xpose.msra.mxu0 0.0
    %195 = vmatprep.subr.mxu0 0.0
    %196 = vmatpush1.xpose.msra.mxu0 0.0
    %197 = vmatprep.subr.mxu0 0.0
    %198 = vmatpush1.xpose.msra.mxu0 0.0
    %199 = vmatprep.subr.mxu0 0.0
    %200 = vmatpush1.xpose.msra.mxu0 0.0
    %201 = vmatprep.subr.mxu0 0.0
    %202 = vmatpush1.xpose.msra.mxu0 0.0
    %203 = vmatprep.subr.mxu0 0.0
    %204 = vmatpush1.xpose.msra.mxu0 0.0
    %205 = vmatprep.subr.mxu0 0.0
    %206 = vmatpush1.xpose.msra.mxu0 0.0
    %207 = vmatprep.subr.mxu0 0.0
    %208 = vmatpush1.xpose.msra.mxu0 0.0
    %209 = vmatprep.subr.mxu0 0.0
    %210 = vmatpush1.xpose.msra.mxu0 0.0
    %211 = vmatprep.subr.mxu0 0.0
    %212 = vmatpush1.xpose.msra.mxu0 0.0
    %213 = vmatprep.subr.mxu0 0.0
    %214 = vmatpush1.xpose.msra.mxu0 0.0
    %215 = vmatprep.subr.mxu0 0.0
    %216 = vmatpush1.xpose.msra.mxu0 0.0
    %217 = vmatprep.subr.mxu0 0.0
    %218 = vmatpush1.xpose.msra.mxu0 %v185
    %219 = vmatprep.subr.mxu0 0.0
    %220 = vmatpush2.xpose.msra.mxu0 0.0
    %221 = vmatprep.subr.mxu0 0.0
    %222 = vmatpush2.xpose.msra.mxu0 0.0
    %223 = vmatprep.subr.mxu0 0.0
    %224 = vmatpush2.xpose.msra.mxu0 0.0
    %225 = vmatprep.subr.mxu0 0.0
    %226 = vmatpush2.xpose.msra.mxu0 0.0
    %227 = vmatprep.subr.mxu0 0.0
    %228 = vmatpush2.xpose.msra.mxu0 0.0
    %229 = vmatprep.subr.mxu0 0.0
    %230 = vmatpush2.xpose.msra.mxu0 0.0
    %231 = vmatprep.subr.mxu0 0.0
    %232 = vmatpush2.xpose.msra.mxu0 0.0
    %233 = vmatprep.subr.mxu0 0.0
    %234 = vmatpush2.xpose.msra.mxu0 0.0
    %235 = vmatprep.subr.mxu0 0.0
    %236 = vmatpush2.xpose.msra.mxu0 0.0
    %237 = vmatprep.subr.mxu0 0.0
    %238 = vmatpush2.xpose.msra.mxu0 0.0
    %239 = vmatprep.subr.mxu0 0.0
    %240 = vmatpush2.xpose.msra.mxu0 0.0
    %241 = vmatprep.subr.mxu0 0.0
    %242 = vmatpush2.xpose.msra.mxu0 0.0
    %243 = vmatprep.subr.mxu0 0.0
    %244 = vmatpush2.xpose.msra.mxu0 0.0
    %245 = vmatprep.subr.mxu0 0.0
    %246 = vmatpush2.xpose.msra.mxu0 0.0
    %247 = vmatprep.subr.mxu0 0.0
    %248 = vmatpush2.xpose.msra.mxu0 0.0
    %249 = vmatprep.subr.mxu0 0.0
    %250 = vmatpush2.xpose.msra.mxu0 0.0
    %251 = vmatprep.mubr.f32.mxu0 0.0
    %252 = vmatmul.mubr.f32.gmra.mxu0 %v179
    %v253 = vpop.f32.mrf.mxu0
    %v254 = vadd.f32 0.0, %v253
    %v255 = vpop.f32.mrf.mxu0
    %256 = vmatprep.mubr.f32.mxu0 0.0
    %257 = vmatmul.mubr.f32.gmra.mxu0 %v182
    %v258 = vpop.f32.mrf.mxu0
    %v259 = vadd.f32 0.0, %v258
    %v260 = vpop.f32.mrf.mxu0
    %261 = vdwg.mxu0
    %v262 = vmul.f32 %v254, 0.17677669
    %v263 = vmul.f32 %v259, 0.17677669
    %v264 = vmul.f32 %v262, 1.442695
    %v265 = vpow.pop %v264
    %v266 = vmul.f32 %v263, 1.442695
    %v267 = vpow.pop %v266
    %vm268 = vcmask 31744
    %v269 = vsel %vm268, %v265, 0.0
    %270 = vadd.xlane.f32.xlu0 %v269
    %v271 = vpop.xlane.xlu0 %270
    %v272 = vsel %vm268, %v267, 0.0
    %273 = vadd.xlane.f32.xlu0 %v272
    %v274 = vpop.xlane.xlu0 %273
    %v275 = vld [vmem:[#allocation10] sm:$0xff]
    %v276 = vadd.f32 %v88, %v275
    %v277 = vadd.f32 %v89, %v275
    %v278 = vsel %vm92, %v276, 0.0
    %279 = vadd.xlane.f32.xlu0 %v278
    %v280 = vpop.xlane.xlu0 %279
    %v281 = vsel %vm92, %v277, 0.0
    %282 = vadd.xlane.f32.xlu0 %v281
    %v283 = vpop.xlane.xlu0 %282
    %v284 = vmul.f32 %v280, %v99
    %v285 = vmul.f32 %v283, %v99
    %v286 = vsub.f32 %v276, %v284
    %v287 = vsub.f32 %v277, %v285
    %v288 = vmul.f32 %v286, %v286
    %v289 = vmul.f32 %v287, %v287
    %v290 = vsel %vm92, %v288, 0.0
    %291 = vadd.xlane.f32.xlu0 %v290
    %v292 = vpop.xlane.xlu0 %291
    %v293 = vsel %vm92, %v289, 0.0
    %294 = vadd.xlane.f32.xlu0 %v293
    %v295 = vpop.xlane.xlu0 %294
    %v296 = vmul.f32 %v292, %v99
    %v297 = vmul.f32 %v295, %v99
    %v298 = vadd.f32 %v296, 1e-12
    %v299 = vadd.f32 %v297, 1e-12
    %v300 = vrsqrt.pop %v298
    %v301 = vrsqrt.pop %v299
    %v302 = vmul.f32 %v286, %v300
    %v303 = vmul.f32 %v287, %v301
    %v304 = vlaneseq
    %v305 = vshrl.u32 %v304, 7
    %v306 = vsub.s32 4, %v305
    %v307 = vrot.slane %v90, %v306
    %v308 = vmul.f32 %v307, %v302
    %v309 = vmul.f32 %v307, %v303
    %v310 = vlaneseq
    %v311 = vshrl.u32 %v310, 7
    %v312 = vsub.s32 5, %v311
    %v313 = vrot.slane %v90, %v312
    %v314 = vadd.f32 %v308, %v313
    %v315 = vadd.f32 %v309, %v313
    %v316 = vld [vmem:[#allocation8] sm:$0xff]
    %v317 = vld [vmem:[#allocation8 + $0x8] sm:$0xff]
    %v318 = vld [vmem:[#allocation8 + $0x10] sm:$0xff]
    %v319 = vld [vmem:[#allocation8 + $0x18] sm:$0xff]
    %v320 = vlaneseq
    %v321 = vshrl.u32 %v320, 7
    %v322 = vsub.s32 2, %v321
    %v323 = vrot.slane %v91, %v322
    %v325 = vsel %vm92, %v314, 0
    %v328 = vsel %vm92, %v315, 0
    %330 = vmatprep.subr.mxu0 0.0
    %331 = vmatpush1.msra.mxu0 0.0
    %332 = vmatprep.subr.mxu0 0.0
    %333 = vmatpush1.msra.mxu0 0.0
    %334 = vmatprep.subr.mxu0 0.0
    %335 = vmatpush1.msra.mxu0 0.0
    %336 = vmatprep.subr.mxu0 0.0
    %337 = vmatpush1.msra.mxu0 0.0
    %338 = vmatprep.subr.mxu0 0.0
    %339 = vmatpush1.msra.mxu0 0.0
    %340 = vmatprep.subr.mxu0 0.0
    %341 = vmatpush1.msra.mxu0 0.0
    %342 = vmatprep.subr.mxu0 0.0
    %343 = vmatpush1.msra.mxu0 0.0
    %344 = vmatprep.subr.mxu0 0.0
    %345 = vmatpush1.msra.mxu0 0.0
    %346 = vmatprep.subr.mxu0 0.0
    %347 = vmatpush1.msra.mxu0 0.0
    %348 = vmatprep.subr.mxu0 0.0
    %349 = vmatpush1.msra.mxu0 0.0
    %350 = vmatprep.subr.mxu0 0.0
    %351 = vmatpush1.msra.mxu0 0.0
    %352 = vmatprep.subr.mxu0 0.0
    %353 = vmatpush1.msra.mxu0 0.0
    %354 = vmatprep.subr.mxu0 0.0
    %355 = vmatpush1.msra.mxu0 %v319
    %356 = vmatprep.subr.mxu0 0.0
    %357 = vmatpush1.msra.mxu0 %v318
    %358 = vmatprep.subr.mxu0 0.0
    %359 = vmatpush1.msra.mxu0 %v317
    %360 = vmatprep.subr.mxu0 0.0
    %361 = vmatpush1.msra.mxu0 %v316
    %362 = vmatprep.subr.mxu0 0.0
    %363 = vmatpush2.msra.mxu0 0.0
    %364 = vmatprep.subr.mxu0 0.0
    %365 = vmatpush2.msra.mxu0 0.0
    %366 = vmatprep.subr.mxu0 0.0
    %367 = vmatpush2.msra.mxu0 0.0
    %368 = vmatprep.subr.mxu0 0.0
    %369 = vmatpush2.msra.mxu0 0.0
    %370 = vmatprep.subr.mxu0 0.0
    %371 = vmatpush2.msra.mxu0 0.0
    %372 = vmatprep.subr.mxu0 0.0
    %373 = vmatpush2.msra.mxu0 0.0
    %374 = vmatprep.subr.mxu0 0.0
    %375 = vmatpush2.msra.mxu0 0.0
    %376 = vmatprep.subr.mxu0 0.0
    %377 = vmatpush2.msra.mxu0 0.0
    %378 = vmatprep.subr.mxu0 0.0
    %379 = vmatpush2.msra.mxu0 0.0
    %380 = vmatprep.subr.mxu0 0.0
    %381 = vmatpush2.msra.mxu0 0.0
    %382 = vmatprep.subr.mxu0 0.0
    %383 = vmatpush2.msra.mxu0 0.0
    %384 = vmatprep.subr.mxu0 0.0
    %385 = vmatpush2.msra.mxu0 0.0
    %386 = vmatprep.subr.mxu0 0.0
    %387 = vmatpush2.msra.mxu0 0.0
    %388 = vmatprep.subr.mxu0 0.0
    %389 = vmatpush2.msra.mxu0 0.0
    %390 = vmatprep.subr.mxu0 0.0
    %391 = vmatpush2.msra.mxu0 0.0
    %392 = vmatprep.subr.mxu0 0.0
    %393 = vmatpush2.msra.mxu0 0.0
    %394 = vmatprep.mubr.f32.mxu0 0.0
    %395 = vmatmul.mubr.f32.gmra.mxu0 %v325
    %v396 = vpop.f32.mrf.mxu0
    %v397 = vadd.f32 %v323, %v396
    %v398 = vpop.f32.mrf.mxu0
    %399 = vmatprep.mubr.f32.mxu0 0.0
    %400 = vmatmul.mubr.f32.gmra.mxu0 %v328
    %v401 = vpop.f32.mrf.mxu0
    %v402 = vadd.f32 %v323, %v401
    %v403 = vpop.f32.mrf.mxu0
    %404 = vdwg.mxu0
    %v405 = vmax.f32 %v397, 0.0
    %v406 = vmax.f32 %v402, 0.0
    %v407 = vadd.f32 %v314, %v405
    %v408 = vadd.f32 %v315, %v406
    %v410 = vrot.slane %v275, 4
    %v412 = vadd.f32 %v91, %v410
    %v413 = vlaneseq
    %v414 = vshrl.u32 %v413, 7
    %v415 = vsub.s32 3, %v414
    %v416 = vrot.slane %v412, %v415
    %v419 = vrot.slane %v88, 7
    %v420 = vrot.slane %v89, 6
    %vm421 = vcmask 1041409
    %v422 = vsel %vm421, %v420, %v419
    %v424 = vadd.f32 %v416, %v422
    %vm425 = vcmask 254976
    %v426 = vsel %vm425, %v424, 0.0
    %427 = vadd.xlane.f32.xlu0 %v426
    %v428 = vpop.xlane.xlu0 %427
    %v429 = vmul.f32 %v428, %v99
    %v430 = vsub.f32 %v424, %v429
    %v431 = vmul.f32 %v430, %v430
    %v432 = vsel %vm425, %v431, 0.0
    %433 = vadd.xlane.f32.xlu0 %v432
    %v434 = vpop.xlane.xlu0 %433
    %v435 = vmul.f32 %v434, %v99
    %v436 = vadd.f32 %v435, 1e-12
    %v437 = vrsqrt.pop %v436
    %v438 = vmul.f32 %v430, %v437
    %v439 = vlaneseq
    %v440 = vshrl.u32 %v439, 7
    %v441 = vsub.s32 6, %v440
    %v442 = vrot.slane %v90, %v441
    %v443 = vmul.f32 %v442, %v438
    %v444 = vlaneseq
    %v445 = vshrl.u32 %v444, 7
    %v446 = vsub.s32 7, %v445
    %v447 = vrot.slane %v90, %v446
    %v448 = vadd.f32 %v443, %v447
    %v451 = vunpack.c.l.s4 1966171168
    %v452 = vunpack.c.0.s8 %v451
    %v453 = vlaneseq
    %v454 = vshrl.u32 %v453, 7
    %v455 = vsub.s32 %v452, %v454
    %v456 = vrot.slane %v448, %v455
    %v457 = vcombine.high %v456, %v456
    %v459 = vunpack.c.l.s4 1966171168
    %v460 = vunpack.c.0.s8 %v459
    %v461 = vlaneseq
    %v462 = vshrl.u32 %v461, 7
    %v463 = vsub.s32 %v460, %v462
    %v464 = vrot.slane %v456, %v463
    %v466 = vunpack.c.l.s4 1966171168
    %v467 = vunpack.c.0.s8 %v466
    %v468 = vlaneseq
    %v469 = vshrl.u32 %v468, 7
    %v470 = vsub.s32 %v467, %v469
    %v471 = vrot.slane %v457, %v470
    %v472 = vlaneseq
    %v473 = vshrl.u32 %v472, 7
    %v474 = vsub.s32 0, %v473
    %v475 = vrot.slane %v464, %v474
    %v476 = vlaneseq
    %v477 = vshrl.u32 %v476, 7
    %v478 = vsub.s32 0, %v477
    %v479 = vrot.slane %v471, %v478
    %v482 = vmul.f32 %v407, %v475
    %v483 = vmul.f32 %v408, %v479
    %v484 = vsel %vm92, %v482, 0.0
    %485 = vadd.xlane.f32.xlu0 %v484
    %v486 = vpop.xlane.xlu0 %485
    %v487 = vsel %vm92, %v483, 0.0
    %488 = vadd.xlane.f32.xlu0 %v487
    %v489 = vpop.xlane.xlu0 %488
    %v490 = vmul.f32 %v486, 0.17677669
    %v491 = vmul.f32 %v489, 0.17677669
    %v492 = vrot.slane %v490, 4
    %v493 = vmax.f32 %v490, %v492
    %v494 = vrot.slane %v493, 2
    %v495 = vmax.f32 %v493, %v494
    %v496 = vrot.slane %v495, 1
    %v497 = vmax.f32 %v495, %v496
    %v498 = vrot.slane %v491, 4
    %v499 = vmax.f32 %v491, %v498
    %v500 = vrot.slane %v499, 2
    %v501 = vmax.f32 %v499, %v500
    %v502 = vrot.slane %v501, 1
    %v503 = vmax.f32 %v501, %v502
    %v504 = vsub.f32 %v490, %v497
    %v505 = vsub.f32 %v491, %v503
    %v506 = vmul.f32 %v504, 1.442695
    %v507 = vpow.pop %v506
    %v508 = vmul.f32 %v505, 1.442695
    %v509 = vpow.pop %v508
    %v510 = vrot.slane %v507, 4
    %v511 = vadd.f32 %v507, %v510
    %v512 = vrot.slane %v511, 2
    %v513 = vadd.f32 %v511, %v512
    %v514 = vrot.slane %v513, 1
    %v515 = vadd.f32 %v513, %v514
    %v516 = vrot.slane %v509, 4
    %v517 = vadd.f32 %v509, %v516
    %v518 = vrot.slane %v517, 2
    %v519 = vadd.f32 %v517, %v518
    %v520 = vrot.slane %v519, 1
    %v521 = vadd.f32 %v519, %v520
    %v522 = vrcp.pop %v271
    %v523 = vrcp.pop %v274
    %v524 = vmul.f32 %v507, %v522
    %v525 = vmul.f32 %v509, %v523
    %v526 = vrcp.pop %v515
    %v527 = vrcp.pop %v521
    %v528 = vmul.f32 %v524, %v526
    %v529 = vmul.f32 %v525, %v527
    %v530 = vmul.f32 %v265, %v528
    %v531 = vmul.f32 %v267, %v529
    %v532 = vld [vmem:[%s5] sm:$0xf]
    %534 = vset.pattern.permute.xlu0 0
    %535 = vperm.xlu0 %534, %v530
    %v536 = vpop.permute.xlu0 %535
    %539 = vset.pattern.permute.xlu0 0
    %540 = vperm.xlu0 %539, %v531
    %v541 = vpop.permute.xlu0 %540
    %v543 = vmul.f32 %v536, %v88
    %v544 = vmul.f32 %v541, %v89
    %v545 = vsel %vm92, %v543, 0.0
    %v546 = vrot.slane %v545, 4
    %v547 = vadd.f32 %v545, %v546
    %v548 = vrot.slane %v547, 2
    %v549 = vadd.f32 %v547, %v548
    %v550 = vrot.slane %v549, 1
    %v551 = vadd.f32 %v549, %v550
    %v552 = vsel %vm92, %v544, 0.0
    %v553 = vrot.slane %v552, 4
    %v554 = vadd.f32 %v552, %v553
    %v555 = vrot.slane %v554, 2
    %v556 = vadd.f32 %v554, %v555
    %v557 = vrot.slane %v556, 1
    %v558 = vadd.f32 %v556, %v557
    %v559 = vlaneseq
    %v560 = vshrl.u32 %v559, 7
    %v561 = vsub.s32 0, %v560
    %v562 = vrot.slane %v532, %v561
    %v565 = vsel %vm421, %v558, %v551
    %v567 = vadd.f32 %v562, %v565
    %v568 = vsel %vm425, %v567, 0.0
    %569 = vadd.xlane.f32.xlu0 %v568
    %v570 = vpop.xlane.xlu0 %569
    %v571 = vmul.f32 %v570, %v99
    %v572 = vsub.f32 %v567, %v571
    %v573 = vmul.f32 %v572, %v572
    %v574 = vsel %vm425, %v573, 0.0
    %575 = vadd.xlane.f32.xlu0 %v574
    %v576 = vpop.xlane.xlu0 %575
    %v577 = vmul.f32 %v576, %v99
    %v578 = vadd.f32 %v577, 1e-12
    %v579 = vrsqrt.pop %v578
    %v580 = vmul.f32 %v572, %v579
    %v581 = vlaneseq
    %v582 = vshrl.u32 %v581, 7
    %v583 = vsub.s32 0, %v582
    %v584 = vrot.slane %v91, %v583
    %v585 = vmul.f32 %v584, %v580
    %v586 = vlaneseq
    %v587 = vshrl.u32 %v586, 7
    %v588 = vsub.s32 1, %v587
    %v589 = vrot.slane %v91, %v588
    %v590 = vadd.f32 %v585, %v589
    %591 = vset.pattern.permute.xlu0 1
    %592 = vperm.xlu0 %591, %v530
    %v593 = vpop.permute.xlu0 %592
    %595 = vset.pattern.permute.xlu0 1
    %596 = vperm.xlu0 %595, %v531
    %v597 = vpop.permute.xlu0 %596
    %v599 = vmul.f32 %v593, %v88
    %v600 = vmul.f32 %v597, %v89
    %v601 = vsel %vm92, %v599, 0.0
    %v602 = vrot.slane %v601, 4
    %v603 = vadd.f32 %v601, %v602
    %v604 = vrot.slane %v603, 2
    %v605 = vadd.f32 %v603, %v604
    %v606 = vrot.slane %v605, 1
    %v607 = vadd.f32 %v605, %v606
    %v608 = vsel %vm92, %v600, 0.0
    %v609 = vrot.slane %v608, 4
    %v610 = vadd.f32 %v608, %v609
    %v611 = vrot.slane %v610, 2
    %v612 = vadd.f32 %v610, %v611
    %v613 = vrot.slane %v612, 1
    %v614 = vadd.f32 %v612, %v613
    %v615 = vlaneseq
    %v616 = vshrl.u32 %v615, 7
    %v617 = vsub.s32 1, %v616
    %v618 = vrot.slane %v532, %v617
    %v621 = vsel %vm421, %v614, %v607
    %v623 = vadd.f32 %v618, %v621
    %v624 = vsel %vm425, %v623, 0.0
    %625 = vadd.xlane.f32.xlu0 %v624
    %v626 = vpop.xlane.xlu0 %625
    %v627 = vmul.f32 %v626, %v99
    %v628 = vsub.f32 %v623, %v627
    %v629 = vmul.f32 %v628, %v628
    %v630 = vsel %vm425, %v629, 0.0
    %631 = vadd.xlane.f32.xlu0 %v630
    %v632 = vpop.xlane.xlu0 %631
    %v633 = vmul.f32 %v632, %v99
    %v634 = vadd.f32 %v633, 1e-12
    %v635 = vrsqrt.pop %v634
    %v636 = vmul.f32 %v628, %v635
    %v637 = vmul.f32 %v584, %v636
    %v638 = vadd.f32 %v637, %v589
    %639 = vset.pattern.permute.xlu0 2
    %640 = vperm.xlu0 %639, %v530
    %v641 = vpop.permute.xlu0 %640
    %643 = vset.pattern.permute.xlu0 2
    %644 = vperm.xlu0 %643, %v531
    %v645 = vpop.permute.xlu0 %644
    %v647 = vmul.f32 %v641, %v88
    %v648 = vmul.f32 %v645, %v89
    %v649 = vsel %vm92, %v647, 0.0
    %v650 = vrot.slane %v649, 4
    %v651 = vadd.f32 %v649, %v650
    %v652 = vrot.slane %v651, 2
    %v653 = vadd.f32 %v651, %v652
    %v654 = vrot.slane %v653, 1
    %v655 = vadd.f32 %v653, %v654
    %v656 = vsel %vm92, %v648, 0.0
    %v657 = vrot.slane %v656, 4
    %v658 = vadd.f32 %v656, %v657
    %v659 = vrot.slane %v658, 2
    %v660 = vadd.f32 %v658, %v659
    %v661 = vrot.slane %v660, 1
    %v662 = vadd.f32 %v660, %v661
    %v663 = vlaneseq
    %v664 = vshrl.u32 %v663, 7
    %v665 = vsub.s32 2, %v664
    %v666 = vrot.slane %v532, %v665
    %v669 = vsel %vm421, %v662, %v655
    %v671 = vadd.f32 %v666, %v669
    %v672 = vsel %vm425, %v671, 0.0
    %673 = vadd.xlane.f32.xlu0 %v672
    %v674 = vpop.xlane.xlu0 %673
    %v675 = vmul.f32 %v674, %v99
    %v676 = vsub.f32 %v671, %v675
    %v677 = vmul.f32 %v676, %v676
    %v678 = vsel %vm425, %v677, 0.0
    %679 = vadd.xlane.f32.xlu0 %v678
    %v680 = vpop.xlane.xlu0 %679
    %v681 = vmul.f32 %v680, %v99
    %v682 = vadd.f32 %v681, 1e-12
    %v683 = vrsqrt.pop %v682
    %v684 = vmul.f32 %v676, %v683
    %v685 = vmul.f32 %v584, %v684
    %v686 = vadd.f32 %v685, %v589
    %687 = vset.pattern.permute.xlu0 3
    %688 = vperm.xlu0 %687, %v530
    %v689 = vpop.permute.xlu0 %688
    %691 = vset.pattern.permute.xlu0 3
    %692 = vperm.xlu0 %691, %v531
    %v693 = vpop.permute.xlu0 %692
    %v695 = vmul.f32 %v689, %v88
    %v696 = vmul.f32 %v693, %v89
    %v697 = vsel %vm92, %v695, 0.0
    %v698 = vrot.slane %v697, 4
    %v699 = vadd.f32 %v697, %v698
    %v700 = vrot.slane %v699, 2
    %v701 = vadd.f32 %v699, %v700
    %v702 = vrot.slane %v701, 1
    %v703 = vadd.f32 %v701, %v702
    %v704 = vsel %vm92, %v696, 0.0
    %v705 = vrot.slane %v704, 4
    %v706 = vadd.f32 %v704, %v705
    %v707 = vrot.slane %v706, 2
    %v708 = vadd.f32 %v706, %v707
    %v709 = vrot.slane %v708, 1
    %v710 = vadd.f32 %v708, %v709
    %v711 = vlaneseq
    %v712 = vshrl.u32 %v711, 7
    %v713 = vsub.s32 3, %v712
    %v714 = vrot.slane %v532, %v713
    %v717 = vsel %vm421, %v710, %v703
    %v719 = vadd.f32 %v714, %v717
    %v720 = vsel %vm425, %v719, 0.0
    %721 = vadd.xlane.f32.xlu0 %v720
    %v722 = vpop.xlane.xlu0 %721
    %v723 = vmul.f32 %v722, %v99
    %v724 = vsub.f32 %v719, %v723
    %v725 = vmul.f32 %v724, %v724
    %v726 = vsel %vm425, %v725, 0.0
    %727 = vadd.xlane.f32.xlu0 %v726
    %v728 = vpop.xlane.xlu0 %727
    %v729 = vmul.f32 %v728, %v99
    %v730 = vadd.f32 %v729, 1e-12
    %v731 = vrsqrt.pop %v730
    %v732 = vmul.f32 %v724, %v731
    %v733 = vmul.f32 %v584, %v732
    %v734 = vadd.f32 %v733, %v589
    %736 = vrot.lane.b32.xlu0 %v638, 32
    %v737 = vpop.permute.xlu0 %736
    %740 = vrot.lane.b32.xlu0 %v686, 64
    %v741 = vpop.permute.xlu0 %740
    %744 = vrot.lane.b32.xlu0 %v734, 96
    %v745 = vpop.permute.xlu0 %744
    %v747 = vsel %vm92, %v590, %v737
    %vm748 = vcmask 523264
    %v749 = vsel %vm748, %v747, %v741
    %vm750 = vcmask 785408
    %v751 = vsel %vm750, %v749, %v745
    %752 = vst [vmem:[#allocation11] sm:$0x3] %v751
    // Predicated region
    $region46: #{tpu_custom_call.1} parent=1 // pred_check
      _
    $region47: #{tpu_custom_call.1} parent=1 // pred_check_branch
      %754 = sbr.rel (0) target = $region49
    $region48: #{tpu_custom_call.1} parent=1 // pred_region
      %s756 = ssub.s32 32, 32
      %757 = vsyncadd [#allocation4], %s756
      %s759 = sshll.u32 [#allocation11], 4
      %s760 = int_to_ptr.vmem [resolvable:$true] %s759
      %762 = dma.vmem_to_hbm [thread:$0]  %s760, 32, %s6, [#allocation4]
    $region49: #{tpu_custom_call.1} parent=1 // pred_fallthru
      _
    // Predicated region
    $region50: #{tpu_custom_call.1} parent=1 // pred_check
      _
    $region51: #{tpu_custom_call.1} parent=1 // pred_check_branch
      %764 = sbr.rel (0) target = $region53
    $region52: #{tpu_custom_call.1} parent=1 // pred_region
      %765 = dma.done [#allocation4], 32
    $region53: #{tpu_custom_call.1} parent=1 // pred_fallthru
      _
    %766 = vsyncpa [#allocation3], 1
    %767 = vsyncpa [#allocation6], 1
    %768 = vsyncpa [#allocation9], 1
    %769 = vsyncpa [#allocation4], 1

</llo_original>
